<compile_context>
chip_gen: v7x
topology: tpu7x:2x2x1
jax: 0.10.0
libtpu: 0.0.40
codegen_flags: <defaults>
</compile_context>

<pallas_src>
import jax
import jax.numpy as jnp
from jax.experimental import pallas as pl
from jax.experimental.pallas import tpu as pltpu


def mlp_kernel(x_ref, w0_ref, w1_ref, b1_ref, w2_ref, b2_ref, o_ref):
    # x_ref block: (1, F, TILE_S) -> (F, TILE_S); columns are feature vectors.
    x = x_ref[0].astype(jnp.bfloat16)  # no-op if the caller already passes bf16

    # Layer 0: Linear(F -> H1, bias=False) + ReLU    (weight-stationary: W @ x)
    h = jnp.dot(w0_ref[...], x, preferred_element_type=jnp.float32)
    h = jnp.maximum(h, 0.0)

    # Layer 1: Linear(H1 -> H2, bias=True) + ReLU
    h = jnp.dot(w1_ref[...], h.astype(jnp.bfloat16),
                preferred_element_type=jnp.float32)
    h = jnp.maximum(h + b1_ref[...], 0.0)

    # Output layer: Linear(H2 -> 1, bias=True)  -> lane-dense (1, TILE_S) block
    y = jnp.dot(w2_ref[...], h.astype(jnp.bfloat16),
                preferred_element_type=jnp.float32)
    o_ref[0] = (y + b2_ref[...]).astype(o_ref.dtype)


def mlp_model_forward(x, params, *, max_tile_s=2048):
    """x: (B, num_features, S) float32 or bfloat16 (PyTorch layout).
    Returns (B, S) float32."""
    w0, w1, b1, w2, b2 = params
    B, F, S = x.shape
    H1 = w0.shape[0]
    H2 = w1.shape[0]

    # Lane-tile over S.  If S fits in one block, take it whole (always a legal
    # block since it equals the full array dim); otherwise use a multiple of
    # 128 and zero-pad S up to the tile boundary (padded lanes are sliced off).
    if S <= max_tile_s:
        tile_s, s_pad = S, S
    else:
        tile_s = max_tile_s
        s_pad = pl.cdiv(S, tile_s) * tile_s

    xp = x if s_pad == S else jnp.pad(x, ((0, 0), (0, 0), (0, s_pad - S)))
    grid = (B, s_pad // tile_s)

    n_rows = B * S
    cost = pl.CostEstimate(
        flops=2 * n_rows * (F * H1 + H1 * H2 + H2),
        transcendentals=0,
        bytes_accessed=int(
            xp.size * xp.dtype.itemsize
            + sum(int(p.size) * p.dtype.itemsize for p in params)
            + B * s_pad * 4
        ),
    )

    out = pl.pallas_call(
        mlp_kernel,
        out_shape=jax.ShapeDtypeStruct((B, 1, s_pad), jnp.float32),
        grid=grid,
        in_specs=[
            # Streaming input: one (F, TILE_S) column block per grid step.
            pl.BlockSpec((1, F, tile_s), lambda b, s: (b, 0, s)),
            # Weights/biases: constant index_map -> fetched once, VMEM-resident.
            pl.BlockSpec((H1, F), lambda b, s: (0, 0)),
            pl.BlockSpec((H2, H1), lambda b, s: (0, 0)),
            pl.BlockSpec((H2, 1), lambda b, s: (0, 0)),
            pl.BlockSpec((1, H2), lambda b, s: (0, 0)),
            pl.BlockSpec((1, 1), lambda b, s: (0, 0)),
        ],
        out_specs=pl.BlockSpec((1, 1, tile_s), lambda b, s: (b, 0, s)),
        compiler_params=pltpu.CompilerParams(
            dimension_semantics=("parallel", "parallel")),
        cost_estimate=cost,
    )(xp, w0, w1, b1, w2, b2)

    return out.reshape(B, s_pad)[:, :S]


def init_params(key, num_features, list_hidden_dims):
    """Deterministic init mirroring nn.Linear shapes.

    Weights are kept in PyTorch's native (out_dim, in_dim) layout — exactly
    what the weight-stationary kernel (h = W @ x_cols) needs — and stored in
    bfloat16 for the MXU.  Biases are f32 column vectors (out_dim, 1) so they
    broadcast over the lane axis inside the kernel."""
    h1, h2 = list_hidden_dims
    k0, k1, k2, k3, k4 = jax.random.split(key, 5)
    w0 = (jax.random.normal(k0, (h1, num_features), jnp.float32) * 0.1
          ).astype(jnp.bfloat16)                              # Linear(F, h1, bias=False)
    w1 = (jax.random.normal(k1, (h2, h1), jnp.float32) * 0.1
          ).astype(jnp.bfloat16)                              # Linear(h1, h2, bias=True)
    b1 = jax.random.normal(k2, (h2, 1), jnp.float32) * 0.1
    w2 = (jax.random.normal(k3, (1, h2), jnp.float32) * 0.1
          ).astype(jnp.bfloat16)                              # Linear(h2, 1, bias=True)
    b2 = jax.random.normal(k4, (1, 1), jnp.float32) * 0.1
    return (w0, w1, b1, w2, b2)


def mlp_reference(x, params):
    """Pure-JAX reference mirroring the kernel's dtype policy (bf16 matmul
    operands, f32 accumulate) in the original row-major PyTorch orientation."""
    w0, w1, b1, w2, b2 = params
    B, F, S = x.shape
    y = jnp.transpose(x, (0, 2, 1)).reshape(-1, F)            # (N, F)
    h = jnp.maximum(jnp.dot(y.astype(jnp.bfloat16), w0.T,
                            preferred_element_type=jnp.float32), 0.0)
    h = jnp.maximum(jnp.dot(h.astype(jnp.bfloat16), w1.T,
                            preferred_element_type=jnp.float32) + b1.T, 0.0)
    o = jnp.dot(h.astype(jnp.bfloat16), w2.T,
                preferred_element_type=jnp.float32) + b2.T
    return o.reshape(B, S)


def mlp_reference_f32(x, params):
    """All-f32 reference of the original PyTorch forward (loose-tolerance check
    that the bf16 matmul operands stay faithful to the module's semantics)."""
    w0, w1, b1, w2, b2 = params
    B, F, S = x.shape
    y = jnp.transpose(x, (0, 2, 1)).reshape(-1, F)
    h = jnp.maximum(y @ w0.T.astype(jnp.float32), 0.0)
    h = jnp.maximum(h @ w1.T.astype(jnp.float32) + b1.T, 0.0)
    o = h @ w2.T.astype(jnp.float32) + b2.T
    return o.reshape(B, S)


if __name__ == "__main__":
    key = jax.random.PRNGKey(0)
    kx, kp = jax.random.split(key)

    B, F, S = 2, 16, 8                 # batch, num_features, seq
    hidden_dims = (32, 32)

    x = jax.random.normal(kx, (B, F, S), jnp.float32)
    params = init_params(kp, F, hidden_dims)

    y = mlp_model_forward(x, params)
    y = jax.block_until_ready(y)
    assert y.shape == (B, S)

    # Tight check vs a reference with identical dtype policy.
    y_ref = mlp_reference(x, params)
    assert jnp.allclose(y, y_ref, atol=1e-4, rtol=1e-3), "mismatch vs bf16 reference"

    # Loose check vs the pure-f32 PyTorch-semantics reference.
    y_ref32 = mlp_reference_f32(x, params)
    assert jnp.allclose(y, y_ref32, atol=2e-2, rtol=2e-2), "mismatch vs f32 reference"

    print("KERNEL_OK")
</pallas_src>

<mosaic_0001>
module attributes {stable_mosaic.version = 11 : i64} {
  func.func @mlp_kernel(%arg0: i32, %arg1: i32, %arg2: memref<1x16x8xf32, #tpu.memory_space<vmem>>, %arg3: memref<32x16xbf16, #tpu.memory_space<vmem>>, %arg4: memref<32x32xbf16, #tpu.memory_space<vmem>>, %arg5: memref<32x1xf32, #tpu.memory_space<vmem>>, %arg6: memref<1x32xbf16, #tpu.memory_space<vmem>>, %arg7: memref<1x1xf32, #tpu.memory_space<vmem>>, %arg8: memref<1x1x8xf32, #tpu.memory_space<vmem>>) attributes {dimension_semantics = [#tpu.dimension_semantics<parallel>, #tpu.dimension_semantics<parallel>], iteration_bounds = array<i64: 2, 1>, scalar_prefetch = 0 : i64, scratch_operands = 0 : i64, tpu.core_type = #tpu.core_type<tc>, window_params = [{transform_indices = @transform_0, window_bounds = array<i64: 1, 16, 8>}, {pipeline_mode = #tpu.pipeline_mode<synchronous>, transform_indices = @transform_1, window_bounds = array<i64: 32, 16>}, {pipeline_mode = #tpu.pipeline_mode<synchronous>, transform_indices = @transform_2, window_bounds = array<i64: 32, 32>}, {pipeline_mode = #tpu.pipeline_mode<synchronous>, transform_indices = @transform_3, window_bounds = array<i64: 32, 1>}, {pipeline_mode = #tpu.pipeline_mode<synchronous>, transform_indices = @transform_4, window_bounds = array<i64: 1, 32>}, {pipeline_mode = #tpu.pipeline_mode<synchronous>, transform_indices = @transform_5, window_bounds = array<i64: 1, 1>}, {transform_indices = @transform_6, window_bounds = array<i64: 1, 1, 8>}]} {
    %c0 = arith.constant 0 : index
    %c0_0 = arith.constant 0 : index
    %c0_1 = arith.constant 0 : index
    %0 = vector.load %arg2[%c0, %c0_0, %c0_1] : memref<1x16x8xf32, #tpu.memory_space<vmem>>, vector<1x16x8xf32>
    %1 = vector.shape_cast %0 : vector<1x16x8xf32> to vector<16x8xf32>
    %2 = arith.truncf %1 : vector<16x8xf32> to vector<16x8xbf16>
    %c0_2 = arith.constant 0 : index
    %c0_3 = arith.constant 0 : index
    %3 = vector.load %arg3[%c0_2, %c0_3] : memref<32x16xbf16, #tpu.memory_space<vmem>>, vector<32x16xbf16>
    %cst = arith.constant dense<0.000000e+00> : vector<32x8xf32>
    %4 = tpu.matmul %3, %2, %cst {dimension_numbers = #tpu.dot_dimension_numbers<[1], [0], [0], [1], [0, 0, 1, 1], [], []>} : vector<32x16xbf16>, vector<16x8xbf16>, vector<32x8xf32> -> vector<32x8xf32>
    %cst_4 = arith.constant 0.000000e+00 : f32
    %5 = vector.broadcast %cst_4 : f32 to vector<32x8xf32>
    %6 = arith.maximumf %4, %5 : vector<32x8xf32>
    %c0_5 = arith.constant 0 : index
    %c0_6 = arith.constant 0 : index
    %7 = vector.load %arg4[%c0_5, %c0_6] : memref<32x32xbf16, #tpu.memory_space<vmem>>, vector<32x32xbf16>
    %8 = arith.truncf %6 : vector<32x8xf32> to vector<32x8xbf16>
    %cst_7 = arith.constant dense<0.000000e+00> : vector<32x8xf32>
    %9 = tpu.matmul %7, %8, %cst_7 {dimension_numbers = #tpu.dot_dimension_numbers<[1], [0], [0], [1], [0, 0, 1, 1], [], []>} : vector<32x32xbf16>, vector<32x8xbf16>, vector<32x8xf32> -> vector<32x8xf32>
    %c0_8 = arith.constant 0 : index
    %c0_9 = arith.constant 0 : index
    %10 = vector.load %arg5[%c0_8, %c0_9] : memref<32x1xf32, #tpu.memory_space<vmem>>, vector<32x1xf32>
    %11 = vector.broadcast %10 : vector<32x1xf32> to vector<32x8xf32>
    %12 = arith.addf %9, %11 : vector<32x8xf32>
    %cst_10 = arith.constant 0.000000e+00 : f32
    %13 = vector.broadcast %cst_10 : f32 to vector<32x8xf32>
    %14 = arith.maximumf %12, %13 : vector<32x8xf32>
    %c0_11 = arith.constant 0 : index
    %c0_12 = arith.constant 0 : index
    %15 = vector.load %arg6[%c0_11, %c0_12] : memref<1x32xbf16, #tpu.memory_space<vmem>>, vector<1x32xbf16>
    %16 = arith.truncf %14 : vector<32x8xf32> to vector<32x8xbf16>
    %cst_13 = arith.constant dense<0.000000e+00> : vector<1x8xf32>
    %17 = tpu.matmul %15, %16, %cst_13 {dimension_numbers = #tpu.dot_dimension_numbers<[1], [0], [0], [1], [0, 0, 1, 1], [], []>} : vector<1x32xbf16>, vector<32x8xbf16>, vector<1x8xf32> -> vector<1x8xf32>
    %c0_14 = arith.constant 0 : index
    %c0_15 = arith.constant 0 : index
    %18 = vector.load %arg7[%c0_14, %c0_15] : memref<1x1xf32, #tpu.memory_space<vmem>>, vector<1x1xf32>
    %19 = vector.broadcast %18 : vector<1x1xf32> to vector<1x8xf32>
    %20 = arith.addf %17, %19 : vector<1x8xf32>
    %c0_16 = arith.constant 0 : index
    %c0_17 = arith.constant 0 : index
    %c0_18 = arith.constant 0 : index
    %21 = vector.load %arg8[%c0_16, %c0_17, %c0_18] : memref<1x1x8xf32, #tpu.memory_space<vmem>>, vector<1x1x8xf32>
    %22 = vector.shape_cast %21 : vector<1x1x8xf32> to vector<1x8xf32>
    %23 = vector.shape_cast %20 : vector<1x8xf32> to vector<1x1x8xf32>
    tpu.vector_store %arg8[%c0_16, %c0_17, %c0_18], %23 {strides = array<i32>} : memref<1x1x8xf32, #tpu.memory_space<vmem>>, vector<1x1x8xf32>,
    return
  }
  func.func @transform_0(%arg0: i32, %arg1: i32) -> (i32, i32, i32) {
    %c0_i32 = arith.constant 0 : i32
    %c0_i32_0 = arith.constant 0 : i32
    return %arg0, %c0_i32, %arg1 : i32, i32, i32
  }
  func.func @transform_1(%arg0: i32, %arg1: i32) -> (i32, i32) {
    %c0_i32 = arith.constant 0 : i32
    %c0_i32_0 = arith.constant 0 : i32
    %c0_i32_1 = arith.constant 0 : i32
    return %c0_i32, %c0_i32_0 : i32, i32
  }
  func.func @transform_2(%arg0: i32, %arg1: i32) -> (i32, i32) {
    %c0_i32 = arith.constant 0 : i32
    %c0_i32_0 = arith.constant 0 : i32
    %c0_i32_1 = arith.constant 0 : i32
    return %c0_i32, %c0_i32_0 : i32, i32
  }
  func.func @transform_3(%arg0: i32, %arg1: i32) -> (i32, i32) {
    %c0_i32 = arith.constant 0 : i32
    %c0_i32_0 = arith.constant 0 : i32
    %c0_i32_1 = arith.constant 0 : i32
    return %c0_i32, %c0_i32_0 : i32, i32
  }
  func.func @transform_4(%arg0: i32, %arg1: i32) -> (i32, i32) {
    %c0_i32 = arith.constant 0 : i32
    %c0_i32_0 = arith.constant 0 : i32
    %c0_i32_1 = arith.constant 0 : i32
    return %c0_i32, %c0_i32_0 : i32, i32
  }
  func.func @transform_5(%arg0: i32, %arg1: i32) -> (i32, i32) {
    %c0_i32 = arith.constant 0 : i32
    %c0_i32_0 = arith.constant 0 : i32
    %c0_i32_1 = arith.constant 0 : i32
    return %c0_i32, %c0_i32_0 : i32, i32
  }
  func.func @transform_6(%arg0: i32, %arg1: i32) -> (i32, i32, i32) {
    %c0_i32 = arith.constant 0 : i32
    %c0_i32_0 = arith.constant 0 : i32
    return %arg0, %c0_i32, %arg1 : i32, i32, i32
  }
}

</mosaic_0001>

<llo_original>
// kernel: tpu_custom_call.1
$region0: #{tpu_custom_call.1}
  #allocation0 [shape = 'u32[]', space=smem, size = 0x4, offset = 0x4, fixed_abs, tag = 'smem constant byte address 0x4 - core index']
  #allocation1 [shape = 'u32[144,128]{1,0:T(1,128)}', space=vmem, size = 0x12000, scoped, tag = 'internal scratch']
  #allocation2 [shape = 'f32[1,1]{1,0:T(1,128)S(1)}', space=vmem, size = 0x200, scoped, tag = 'scoped memory for tpu_custom_call.1']
  %s0 = inlined_call_operand.vmem [shape: f32[2,16,8], index: 0, kind: input, shape index: {}]
  %s1 = inlined_call_operand.vmem [shape: bf16[32,16], index: 1, kind: input, shape index: {}]
  %s2 = inlined_call_operand.vmem [shape: bf16[32,32], index: 2, kind: input, shape index: {}]
  %s3 = inlined_call_operand.vmem [shape: f32[32,1], index: 3, kind: input, shape index: {}]
  %s4 = inlined_call_operand.vmem [shape: bf16[1,32], index: 4, kind: input, shape index: {}]
  %s5 = inlined_call_operand.<no memory space> [shape: f32[1,1], index: 5, kind: input, shape index: {}]
  %s6 = inlined_call_operand.hbm [shape: f32[2,1,8], index: 6, kind: output, shape index: {}]
  %s7 = sld [smem:[#allocation0]]
  $region57: #{tpu_custom_call.1} parent=0
    _
  %s9 = ssub.s32 1, %s7
  %s10 = scalar_select 0, %s9, %s7
  %v11 = vstv %s5
  %12 = vst [vmem:[#allocation2] sm:$0x1] %v11
  $region1: #{tpu_custom_call.1} parent=0
    #allocation3 [shape = 'u8[1024]{0}', space=vmem, size = 0x400, scoped, tag = 'output window, operand 0']
    #allocation4 [shape = 's32[2]{0}', space=sflag, size = 0x8, scoped, tag = 'scoped memory for tpu_custom_call.1']
    %13 = vsyncpa [#allocation4], 0
    %s14 = scalar_lea.sflag [#allocation4], 1
    %15 = vsyncpa %s14, 0
    loop: start=0, step=1, limit=4
    $region2: #{tpu_custom_call.1} parent=1 // loop_pre_header
      _
    $region3: #{tpu_custom_call.1} parent=1 // loop_header
      %s17 = sphi 0, %s21
      %p18 = scmp.ge.s32.totalorder %s17, 4
      %s24 = sphi 0, %s36
      %s25 = sphi 0, %s32
      %s26 = sphi 0, %s24
      %s27 = sphi 0, %s25
      %s28 = sphi 0, %s26
      %s29 = sphi 0, %s27
      %s41 = sphi 0, %s43
      %s44 = sphi 0, %s41
      %s45 = sphi 0, %s44
      %s61 = sphi 0, %s45
      %s65 = sphi 0, %s65
      %s67 = sphi 0, %s65
      %s68 = sphi 0, %s67
      %s82 = sphi 0, %s68
      %s86 = sphi 0, %s86
      %s88 = sphi 0, %s86
      %s89 = sphi 0, %s88
      %s103 = sphi 0, %s89
      %s107 = sphi 0, %s107
      %s109 = sphi 0, %s107
      %s110 = sphi 0, %s109
      %s124 = sphi 0, %s110
      %s128 = sphi 0, %s128
      %s130 = sphi 0, %s128
      %s131 = sphi 0, %s130
      %s145 = sphi 0, %s131
      %s149 = sphi 0, %s149
      %s151 = sphi 0, %s149
      %s152 = sphi 0, %s151
      %s166 = sphi 0, %s152
      %s174 = sphi 0, %s176
      %s177 = sphi 0, %s174
      %s178 = sphi 0, %s177
      %s194 = sphi 0, %s178
    $region4: #{tpu_custom_call.1} parent=1 // loop_header_branch
      %20 = sbr.rel (%p18) target = $region8
    $region5: #{tpu_custom_call.1} parent=1 // loop_body
      %s22 = ssub.s32 %s17, 1
      %s23 = ssub.s32 %s17, 2
      %s30 = sadd.s32 1, %s25
      %p31 = scmp.ge.s32.totalorder %s30, 1
      %s32 = scalar_select %p31, 0, %s30
      %s33 = sadd.s32 1, %s24
      %s34 = scalar_select %p31, %s33, %s24
      %p35 = scmp.ge.s32.totalorder %s34, 2
      %s36 = scalar_select %p35, 0, %s34
      %s37 = ssub.s32 %s24, %s36
      %s38 = ssub.s32 %s25, %s32
      %s39 = sor.u32 %s37, %s38
      %p40 = scmp.eq.s32.totalorder %s39, 0
      %s42 = sadd.s32 %s41, 1
      %s43 = scalar_select %p40, %s41, %s42
      %p46 = pneg %p40
      %p47 = scmp.eq.s32.totalorder %s17, 1
      %p48 = por %p46, %p47
      %p49 = scmp.ne.s32.totalorder %s41, %s44
      %p50 = scmp.eq.s32.totalorder %s17, 0
      %p51 = por %p49, %p50
      %p52 = scmp.ne.s32.totalorder %s41, %s44
      %p53 = scmp.eq.s32.totalorder %s22, 1
      %p54 = por %p52, %p53
      %p55 = scmp.ne.s32.totalorder %s44, %s45
      %p56 = scmp.eq.s32.totalorder %s22, 0
      %p57 = por %p55, %p56
      %p58 = scmp.ne.s32.totalorder %s44, %s45
      %p59 = scmp.eq.s32.totalorder %s23, 1
      %p60 = por %p58, %p59
      %p62 = scmp.ne.s32.totalorder %s45, %s61
      %p63 = scmp.eq.s32.totalorder %s23, 0
      %p64 = por %p62, %p63
      %s66 = sadd.s32 %s65, 1
      %p69 = scmp.eq.s32.totalorder %s17, 1
      %p70 = scmp.ne.s32.totalorder %s65, %s67
      %p71 = scmp.eq.s32.totalorder %s17, 0
      %p72 = por %p70, %p71
      %p73 = scmp.ne.s32.totalorder %s65, %s67
      %p74 = scmp.eq.s32.totalorder %s22, 1
      %p75 = por %p73, %p74
      %p76 = scmp.ne.s32.totalorder %s67, %s68
      %p77 = scmp.eq.s32.totalorder %s22, 0
      %p78 = por %p76, %p77
      %p79 = scmp.ne.s32.totalorder %s67, %s68
      %p80 = scmp.eq.s32.totalorder %s23, 1
      %p81 = por %p79, %p80
      %p83 = scmp.ne.s32.totalorder %s68, %s82
      %p84 = scmp.eq.s32.totalorder %s23, 0
      %p85 = por %p83, %p84
      %s87 = sadd.s32 %s86, 1
      %p90 = scmp.eq.s32.totalorder %s17, 1
      %p91 = scmp.ne.s32.totalorder %s86, %s88
      %p92 = scmp.eq.s32.totalorder %s17, 0
      %p93 = por %p91, %p92
      %p94 = scmp.ne.s32.totalorder %s86, %s88
      %p95 = scmp.eq.s32.totalorder %s22, 1
      %p96 = por %p94, %p95
      %p97 = scmp.ne.s32.totalorder %s88, %s89
      %p98 = scmp.eq.s32.totalorder %s22, 0
      %p99 = por %p97, %p98
      %p100 = scmp.ne.s32.totalorder %s88, %s89
      %p101 = scmp.eq.s32.totalorder %s23, 1
      %p102 = por %p100, %p101
      %p104 = scmp.ne.s32.totalorder %s89, %s103
      %p105 = scmp.eq.s32.totalorder %s23, 0
      %p106 = por %p104, %p105
      %s108 = sadd.s32 %s107, 1
      %p111 = scmp.eq.s32.totalorder %s17, 1
      %p112 = scmp.ne.s32.totalorder %s107, %s109
      %p113 = scmp.eq.s32.totalorder %s17, 0
      %p114 = por %p112, %p113
      %p115 = scmp.ne.s32.totalorder %s107, %s109
      %p116 = scmp.eq.s32.totalorder %s22, 1
      %p117 = por %p115, %p116
      %p118 = scmp.ne.s32.totalorder %s109, %s110
      %p119 = scmp.eq.s32.totalorder %s22, 0
      %p120 = por %p118, %p119
      %p121 = scmp.ne.s32.totalorder %s109, %s110
      %p122 = scmp.eq.s32.totalorder %s23, 1
      %p123 = por %p121, %p122
      %p125 = scmp.ne.s32.totalorder %s110, %s124
      %p126 = scmp.eq.s32.totalorder %s23, 0
      %p127 = por %p125, %p126
      %s129 = sadd.s32 %s128, 1
      %p132 = scmp.eq.s32.totalorder %s17, 1
      %p133 = scmp.ne.s32.totalorder %s128, %s130
      %p134 = scmp.eq.s32.totalorder %s17, 0
      %p135 = por %p133, %p134
      %p136 = scmp.ne.s32.totalorder %s128, %s130
      %p137 = scmp.eq.s32.totalorder %s22, 1
      %p138 = por %p136, %p137
      %p139 = scmp.ne.s32.totalorder %s130, %s131
      %p140 = scmp.eq.s32.totalorder %s22, 0
      %p141 = por %p139, %p140
      %p142 = scmp.ne.s32.totalorder %s130, %s131
      %p143 = scmp.eq.s32.totalorder %s23, 1
      %p144 = por %p142, %p143
      %p146 = scmp.ne.s32.totalorder %s131, %s145
      %p147 = scmp.eq.s32.totalorder %s23, 0
      %p148 = por %p146, %p147
      %s150 = sadd.s32 %s149, 1
      %p153 = scmp.eq.s32.totalorder %s17, 1
      %p154 = scmp.ne.s32.totalorder %s149, %s151
      %p155 = scmp.eq.s32.totalorder %s17, 0
      %p156 = por %p154, %p155
      %p157 = scmp.ne.s32.totalorder %s149, %s151
      %p158 = scmp.eq.s32.totalorder %s22, 1
      %p159 = por %p157, %p158
      %p160 = scmp.ne.s32.totalorder %s151, %s152
      %p161 = scmp.eq.s32.totalorder %s22, 0
      %p162 = por %p160, %p161
      %p163 = scmp.ne.s32.totalorder %s151, %s152
      %p164 = scmp.eq.s32.totalorder %s23, 1
      %p165 = por %p163, %p164
      %p167 = scmp.ne.s32.totalorder %s152, %s166
      %p168 = scmp.eq.s32.totalorder %s23, 0
      %p169 = por %p167, %p168
      %s170 = ssub.s32 %s24, %s36
      %s171 = ssub.s32 %s25, %s32
      %s172 = sor.u32 %s170, %s171
      %p173 = scmp.eq.s32.totalorder %s172, 0
      %s175 = sadd.s32 %s174, 1
      %s176 = scalar_select %p173, %s174, %s175
      %p179 = pneg %p173
      %p180 = scmp.eq.s32.totalorder %s17, 1
      %p181 = por %p179, %p180
      %p182 = scmp.ne.s32.totalorder %s174, %s177
      %p183 = scmp.eq.s32.totalorder %s17, 0
      %p184 = por %p182, %p183
      %p185 = scmp.ne.s32.totalorder %s174, %s177
      %p186 = scmp.eq.s32.totalorder %s22, 1
      %p187 = por %p185, %p186
      %p188 = scmp.ne.s32.totalorder %s177, %s178
      %p189 = scmp.eq.s32.totalorder %s22, 0
      %p190 = por %p188, %p189
      %p191 = scmp.ne.s32.totalorder %s177, %s178
      %p192 = scmp.eq.s32.totalorder %s23, 1
      %p193 = por %p191, %p192
      %p195 = scmp.ne.s32.totalorder %s178, %s194
      %p196 = scmp.eq.s32.totalorder %s23, 0
      %p197 = por %p195, %p196
      %p198 = scmp.le.s32.totalorder 1, %s17
      %p199 = scmp.lt.s32.totalorder %s17, 3
      %p200 = pnand %p198, %p199
      %p201 = pneg %p200
      // Predicated region
      $region9: #{tpu_custom_call.1} parent=5 // pred_check
        _
      $region10: #{tpu_custom_call.1} parent=5 // pred_check_branch
        %203 = sbr.rel (%p200) target = $region12
      $region11: #{tpu_custom_call.1} parent=5 // pred_region
        %s204 = ssub.s32 %s17, 1
        // Predicated region
        $region13: #{tpu_custom_call.1} parent=11 // pred_check
          %p205 = pneg %p78
        $region14: #{tpu_custom_call.1} parent=11 // pred_check_branch
          %207 = sbr.rel (%p205) target = $region16
        $region15: #{tpu_custom_call.1} parent=11 // pred_region
          _
        $region16: #{tpu_custom_call.1} parent=11 // pred_fallthru
          _
        // Predicated region
        $region17: #{tpu_custom_call.1} parent=11 // pred_check
          %p208 = pneg %p99
        $region18: #{tpu_custom_call.1} parent=11 // pred_check_branch
          %210 = sbr.rel (%p208) target = $region20
        $region19: #{tpu_custom_call.1} parent=11 // pred_region
          _
        $region20: #{tpu_custom_call.1} parent=11 // pred_fallthru
          _
        // Predicated region
        $region21: #{tpu_custom_call.1} parent=11 // pred_check
          %p211 = pneg %p120
        $region22: #{tpu_custom_call.1} parent=11 // pred_check_branch
          %213 = sbr.rel (%p211) target = $region24
        $region23: #{tpu_custom_call.1} parent=11 // pred_region
          _
        $region24: #{tpu_custom_call.1} parent=11 // pred_fallthru
          _
        // Predicated region
        $region25: #{tpu_custom_call.1} parent=11 // pred_check
          %p214 = pneg %p141
        $region26: #{tpu_custom_call.1} parent=11 // pred_check_branch
          %216 = sbr.rel (%p214) target = $region28
        $region27: #{tpu_custom_call.1} parent=11 // pred_region
          _
        $region28: #{tpu_custom_call.1} parent=11 // pred_fallthru
          _
        // Predicated region
        $region29: #{tpu_custom_call.1} parent=11 // pred_check
          %p217 = pneg %p162
        $region30: #{tpu_custom_call.1} parent=11 // pred_check_branch
          %219 = sbr.rel (%p217) target = $region32
        $region31: #{tpu_custom_call.1} parent=11 // pred_region
          _
        $region32: #{tpu_custom_call.1} parent=11 // pred_fallthru
          _
      $region12: #{tpu_custom_call.1} parent=5 // pred_fallthru
        _
      %p220 = scmp.lt.s32.totalorder %s17, 2
      // Predicated region
      $region33: #{tpu_custom_call.1} parent=5 // pred_check
        %p221 = pneg %p220
      $region34: #{tpu_custom_call.1} parent=5 // pred_check_branch
        %223 = sbr.rel (%p221) target = $region36
      $region35: #{tpu_custom_call.1} parent=5 // pred_region
        // Predicated region
        $region37: #{tpu_custom_call.1} parent=35 // pred_check
          %p224 = pneg %p51
        $region38: #{tpu_custom_call.1} parent=35 // pred_check_branch
          %226 = sbr.rel (%p224) target = $region40
        $region39: #{tpu_custom_call.1} parent=35 // pred_region
          %p227 = scmp.lt.s32.totalorder %s24, 1
          %s228 = scalar_select %p227, %s24, 1
          %p229 = scmp.lt.s32.totalorder %s25, 0
          %s230 = scalar_select %p229, %s25, 0
          %s231 = smul.addr %s228, 2
          %s232 = sadd.s32 %s230, %s231
          %s233 = smul.addr %s232, 8
          %s234 = scalar_lea.vmem %s0, %s233
        $region40: #{tpu_custom_call.1} parent=35 // pred_fallthru
          _
      $region36: #{tpu_custom_call.1} parent=5 // pred_fallthru
        _
      %p235 = scmp.le.s32.totalorder 1, %s17
      %p236 = scmp.lt.s32.totalorder %s17, 3
      %p237 = pnand %p235, %p236
      %p238 = pneg %p237
      // Predicated region
      $region41: #{tpu_custom_call.1} parent=5 // pred_check
        _
      $region42: #{tpu_custom_call.1} parent=5 // pred_check_branch
        %240 = sbr.rel (%p237) target = $region44
      $region43: #{tpu_custom_call.1} parent=5 // pred_region
        %s241 = ssub.s32 %s17, 1
        %p242 = scmp.lt.s32.totalorder %s26, 1
        %s243 = scalar_select %p242, %s26, 1
        %p244 = scmp.lt.s32.totalorder %s27, 0
        %s245 = scalar_select %p244, %s27, 0
        %s246 = smul.addr %s243, 2
        %s247 = sadd.s32 %s245, %s246
        %s248 = smul.addr %s247, 8
        %s249 = scalar_lea.vmem %s0, %s248
        %p250 = pneg %p57
        %p251 = pneg %p54
        %p252 = pneg %p78
        %p253 = pneg %p75
        %p254 = pneg %p99
        %p255 = pneg %p96
        %p256 = pneg %p120
        %p257 = pneg %p117
        %p258 = pneg %p141
        %p259 = pneg %p138
        %p260 = pneg %p162
        %p261 = pneg %p159
        %p262 = pneg %p190
        %p263 = pneg %p187
        %s264 = sand.u32 %s177, 1
        %s265 = scalar_lea.sflag [#allocation4], %s264
        %s266 = sand.u32 %s177, 1
        %s267 = scalar_lea.vmem [#allocation3], %s266
        %p268 = scmp.lt.s32.totalorder %s26, 1
        %s269 = scalar_select %p268, %s26, 1
        %p270 = scmp.lt.s32.totalorder %s27, 0
        %s271 = scalar_select %p270, %s27, 0
        %s272 = smul.addr %s269, 2
        %s273 = sadd.s32 %s271, %s272
        %s274 = smul.addr %s273, 8
        %s275 = scalar_lea.vmem %s0, %s274
        %v277 = vld [vmem:[%s275] sm:$0xff]
        %v278 = vld [vmem:[%s275 + $0x8] sm:$0xff]
        %v279 = vpack.c.bf16 %v278, %v277
        %v280 = vld [vmem:[%s1] sm:$0xf]
        %v281 = vld [vmem:[%s1 + $0x4] sm:$0xf]
        %v282 = vld [vmem:[%s1 + $0x8] sm:$0xf]
        %v283 = vld [vmem:[%s1 + $0xc] sm:$0xf]
        %v288 = vunpack.c.l.b16 %v280
        %v289 = vunpack.c.l.b16 %v281
        %v290 = vunpack.c.l.b16 %v282
        %v291 = vunpack.c.l.b16 %v283
        %v292 = vpack.c.b16 %v289, %v288
        %v293 = vpack.c.b16 %v291, %v290
        %vm294 = vcmask 130048
        %v296 = vsel %vm294, %v292, 0
        %v299 = vsel %vm294, %v293, 0
        %301 = vmatprep.subr.bf16.mxu0 0
        %302 = vmatpush1.bf16.msra.mxu0 %v279
        %303 = vmatprep.subr.bf16.mxu0 0
        %304 = vmatpush1.bf16.msra.mxu0 0
        %305 = vmatprep.subr.bf16.mxu0 0
        %306 = vmatpush1.bf16.msra.mxu0 0
        %307 = vmatprep.subr.bf16.mxu0 0
        %308 = vmatpush1.bf16.msra.mxu0 0
        %309 = vmatprep.subr.bf16.mxu0 0
        %310 = vmatpush1.bf16.msra.mxu0 0
        %311 = vmatprep.subr.bf16.mxu0 0
        %312 = vmatpush1.bf16.msra.mxu0 0
        %313 = vmatprep.subr.bf16.mxu0 0
        %314 = vmatpush1.bf16.msra.mxu0 0
        %315 = vmatprep.subr.bf16.mxu0 0
        %316 = vmatpush1.bf16.msra.mxu0 0
        %317 = vmatprep.subr.bf16.mxu0 0
        %318 = vmatpush1.bf16.msra.mxu0 0
        %319 = vmatprep.subr.bf16.mxu0 0
        %320 = vmatpush1.bf16.msra.mxu0 0
        %321 = vmatprep.subr.bf16.mxu0 0
        %322 = vmatpush1.bf16.msra.mxu0 0
        %323 = vmatprep.subr.bf16.mxu0 0
        %324 = vmatpush1.bf16.msra.mxu0 0
        %325 = vmatprep.subr.bf16.mxu0 0
        %326 = vmatpush1.bf16.msra.mxu0 0
        %327 = vmatprep.subr.bf16.mxu0 0
        %328 = vmatpush1.bf16.msra.mxu0 0
        %329 = vmatprep.subr.bf16.mxu0 0
        %330 = vmatpush1.bf16.msra.mxu0 0
        %331 = vmatprep.subr.bf16.mxu0 0
        %332 = vmatpush1.bf16.msra.mxu0 0
        %333 = vmatprep.mubr.bf16.mxu0 0
        %334 = vmatmul.mubr.bf16.gmra.mrb[0].mxu0 %v296
        %v335 = vpop.f32.mrb[0].mxu0
        %v336 = vadd.f32 0.0, %v335
        %v337 = vpop.f32.mrb[0].mxu0
        %v338 = vpop.f32.mrb[0].mxu0
        %v339 = vadd.f32 0.0, %v338
        %v340 = vpop.f32.mrb[0].mxu0
        %341 = vmatprep.mubr.bf16.mxu0 0
        %342 = vmatmul.mubr.bf16.gmra.mrb[0].mxu0 %v299
        %v343 = vpop.f32.mrb[0].mxu0
        %v344 = vadd.f32 0.0, %v343
        %v345 = vpop.f32.mrb[0].mxu0
        %v346 = vpop.f32.mrb[0].mxu0
        %v347 = vadd.f32 0.0, %v346
        %v348 = vpop.f32.mrb[0].mxu0
        %349 = vdwg.mxu0
        %v350 = vmax.f32 %v336, 0.0
        %v351 = vmax.f32 %v339, 0.0
        %v352 = vmax.f32 %v344, 0.0
        %v353 = vmax.f32 %v347, 0.0
        %v354 = vld [vmem:[%s2] sm:$0xf]
        %v355 = vld [vmem:[%s2 + $0x4] sm:$0xf]
        %v356 = vld [vmem:[%s2 + $0x8] sm:$0xf]
        %v357 = vld [vmem:[%s2 + $0xc] sm:$0xf]
        %v358 = vpack.c.bf16 %v351, %v350
        %v359 = vpack.c.bf16 %v353, %v352
        %v360 = vld [vmem:[%s3] sm:$0xff]
        %v361 = vld [vmem:[%s3 + $0x8] sm:$0xff]
        %v362 = vld [vmem:[%s3 + $0x10] sm:$0xff]
        %v363 = vld [vmem:[%s3 + $0x18] sm:$0xff]
        %365 = vset.pattern.permute.xlu0 0
        %366 = vperm.xlu0 %365, %v360
        %v367 = vpop.permute.xlu0 %366
        %370 = vset.pattern.permute.xlu0 0
        %371 = vperm.xlu0 %370, %v361
        %v372 = vpop.permute.xlu0 %371
        %375 = vset.pattern.permute.xlu0 0
        %376 = vperm.xlu0 %375, %v362
        %v377 = vpop.permute.xlu0 %376
        %380 = vset.pattern.permute.xlu0 0
        %381 = vperm.xlu0 %380, %v363
        %v382 = vpop.permute.xlu0 %381
        %v388 = vunpack.c.l.b16 %v354
        %v389 = vunpack.c.l.b16 %v355
        %v390 = vunpack.c.l.b16 %v356
        %v391 = vunpack.c.l.b16 %v357
        %v392 = vpack.c.b16 %v389, %v388
        %v393 = vpack.c.b16 %v391, %v390
        %vm394 = vcmask 261120
        %v396 = vsel %vm394, %v392, 0
        %v399 = vsel %vm394, %v393, 0
        %401 = vmatprep.subr.bf16.mxu0 0
        %402 = vmatpush1.bf16.msra.mxu0 %v358
        %403 = vmatprep.subr.bf16.mxu0 0
        %404 = vmatpush1.bf16.msra.mxu0 %v359
        %405 = vmatprep.subr.bf16.mxu0 0
        %406 = vmatpush1.bf16.msra.mxu0 0
        %407 = vmatprep.subr.bf16.mxu0 0
        %408 = vmatpush1.bf16.msra.mxu0 0
        %409 = vmatprep.subr.bf16.mxu0 0
        %410 = vmatpush1.bf16.msra.mxu0 0
        %411 = vmatprep.subr.bf16.mxu0 0
        %412 = vmatpush1.bf16.msra.mxu0 0
        %413 = vmatprep.subr.bf16.mxu0 0
        %414 = vmatpush1.bf16.msra.mxu0 0
        %415 = vmatprep.subr.bf16.mxu0 0
        %416 = vmatpush1.bf16.msra.mxu0 0
        %417 = vmatprep.subr.bf16.mxu0 0
        %418 = vmatpush1.bf16.msra.mxu0 0
        %419 = vmatprep.subr.bf16.mxu0 0
        %420 = vmatpush1.bf16.msra.mxu0 0
        %421 = vmatprep.subr.bf16.mxu0 0
        %422 = vmatpush1.bf16.msra.mxu0 0
        %423 = vmatprep.subr.bf16.mxu0 0
        %424 = vmatpush1.bf16.msra.mxu0 0
        %425 = vmatprep.subr.bf16.mxu0 0
        %426 = vmatpush1.bf16.msra.mxu0 0
        %427 = vmatprep.subr.bf16.mxu0 0
        %428 = vmatpush1.bf16.msra.mxu0 0
        %429 = vmatprep.subr.bf16.mxu0 0
        %430 = vmatpush1.bf16.msra.mxu0 0
        %431 = vmatprep.subr.bf16.mxu0 0
        %432 = vmatpush1.bf16.msra.mxu0 0
        %433 = vmatprep.mubr.bf16.mxu0 0
        %434 = vmatmul.mubr.bf16.gmra.mrb[0].mxu0 %v396
        %v435 = vpop.f32.mrb[0].mxu0
        %v436 = vadd.f32 %v367, %v435
        %v437 = vpop.f32.mrb[0].mxu0
        %v438 = vpop.f32.mrb[0].mxu0
        %v439 = vadd.f32 %v372, %v438
        %v440 = vpop.f32.mrb[0].mxu0
        %441 = vmatprep.mubr.bf16.mxu0 0
        %442 = vmatmul.mubr.bf16.gmra.mrb[0].mxu0 %v399
        %v443 = vpop.f32.mrb[0].mxu0
        %v444 = vadd.f32 %v377, %v443
        %v445 = vpop.f32.mrb[0].mxu0
        %v446 = vpop.f32.mrb[0].mxu0
        %v447 = vadd.f32 %v382, %v446
        %v448 = vpop.f32.mrb[0].mxu0
        %449 = vdwg.mxu0
        %v450 = vmax.f32 %v436, 0.0
        %v451 = vmax.f32 %v439, 0.0
        %v452 = vmax.f32 %v444, 0.0
        %v453 = vmax.f32 %v447, 0.0
        %v454 = vld [vmem:[%s4] sm:$0x1]
        %v455 = vpack.c.bf16 %v451, %v450
        %v456 = vpack.c.bf16 %v453, %v452
        %v457 = vld [vmem:[#allocation2] sm:$0x1]
        %459 = vset.pattern.permute.xlu0 0
        %460 = vperm.xlu0 %459, %v457
        %v461 = vpop.permute.xlu0 %460
        %v463 = vlaneseq
        %v464 = vshrl.u32 %v463, 7
        %v465 = vsub.s32 0, %v464
        %v466 = vrot.slane %v461, %v465
        %v468 = vsel %vm394, %v454, 0
        %470 = vmatprep.subr.bf16.mxu0 0
        %471 = vmatpush1.bf16.msra.mxu0 %v455
        %472 = vmatprep.subr.bf16.mxu0 0
        %473 = vmatpush1.bf16.msra.mxu0 %v456
        %474 = vmatprep.subr.bf16.mxu0 0
        %475 = vmatpush1.bf16.msra.mxu0 0
        %476 = vmatprep.subr.bf16.mxu0 0
        %477 = vmatpush1.bf16.msra.mxu0 0
        %478 = vmatprep.subr.bf16.mxu0 0
        %479 = vmatpush1.bf16.msra.mxu0 0
        %480 = vmatprep.subr.bf16.mxu0 0
        %481 = vmatpush1.bf16.msra.mxu0 0
        %482 = vmatprep.subr.bf16.mxu0 0
        %483 = vmatpush1.bf16.msra.mxu0 0
        %484 = vmatprep.subr.bf16.mxu0 0
        %485 = vmatpush1.bf16.msra.mxu0 0
        %486 = vmatprep.subr.bf16.mxu0 0
        %487 = vmatpush1.bf16.msra.mxu0 0
        %488 = vmatprep.subr.bf16.mxu0 0
        %489 = vmatpush1.bf16.msra.mxu0 0
        %490 = vmatprep.subr.bf16.mxu0 0
        %491 = vmatpush1.bf16.msra.mxu0 0
        %492 = vmatprep.subr.bf16.mxu0 0
        %493 = vmatpush1.bf16.msra.mxu0 0
        %494 = vmatprep.subr.bf16.mxu0 0
        %495 = vmatpush1.bf16.msra.mxu0 0
        %496 = vmatprep.subr.bf16.mxu0 0
        %497 = vmatpush1.bf16.msra.mxu0 0
        %498 = vmatprep.subr.bf16.mxu0 0
        %499 = vmatpush1.bf16.msra.mxu0 0
        %500 = vmatprep.subr.bf16.mxu0 0
        %501 = vmatpush1.bf16.msra.mxu0 0
        %502 = vmatprep.mubr.bf16.mxu0 0
        %503 = vmatmul.mubr.bf16.gmra.mrb[0].mxu0 %v468
        %v504 = vpop.f32.mrb[0].mxu0
        %v505 = vadd.f32 %v466, %v504
        %v506 = vpop.f32.mrb[0].mxu0
        %v507 = vpop.f32.mrb[0].mxu0
        %v508 = vpop.f32.mrb[0].mxu0
        %509 = vdwg.mxu0
        %vm510 = vcmask 57344
        %511 = vst.msk [vmem:[%s267] sm:$0x1] %vm510, %v505
        %s512 = sand.u32 %s177, 1
        %s513 = scalar_lea.sflag [#allocation4], %s512
        %s514 = sand.u32 %s177, 1
        %s515 = scalar_lea.vmem [#allocation3], %s514
        // Predicated region
        $region45: #{tpu_custom_call.1} parent=43 // pred_check
          %p516 = pneg %p187
        $region46: #{tpu_custom_call.1} parent=43 // pred_check_branch
          %518 = sbr.rel (%p516) target = $region48
        $region47: #{tpu_custom_call.1} parent=43 // pred_region
          %s520 = ssub.s32 16, 16
          %521 = vsyncadd %s513, %s520
          %s522 = sadd.s32 %s27, %s26
          %s523 = smul.addr %s522, 16
          %s524 = scalar_lea.hbm %s6, %s523
          %s526 = sshll.u32 %s515, 4
          %s527 = int_to_ptr.vmem [resolvable:$true] %s526
          %529 = dma.vmem_to_hbm [thread:$0]  %s527, 16, %s524, %s513
        $region48: #{tpu_custom_call.1} parent=43 // pred_fallthru
          _
      $region44: #{tpu_custom_call.1} parent=5 // pred_fallthru
        _
      %p530 = scmp.le.s32.totalorder 2, %s17
      // Predicated region
      $region49: #{tpu_custom_call.1} parent=5 // pred_check
        %p531 = pneg %p530
      $region50: #{tpu_custom_call.1} parent=5 // pred_check_branch
        %533 = sbr.rel (%p531) target = $region52
      $region51: #{tpu_custom_call.1} parent=5 // pred_region
        %s534 = ssub.s32 %s17, 2
        // Predicated region
        $region53: #{tpu_custom_call.1} parent=51 // pred_check
          %p535 = pneg %p193
        $region54: #{tpu_custom_call.1} parent=51 // pred_check_branch
          %537 = sbr.rel (%p535) target = $region56
        $region55: #{tpu_custom_call.1} parent=51 // pred_region
          %s538 = sand.u32 %s178, 1
          %s539 = scalar_lea.sflag [#allocation4], %s538
          %s540 = sand.u32 %s178, 1
          %s541 = scalar_lea.vmem [#allocation3], %s540
          %542 = dma.done %s539, 16
        $region56: #{tpu_custom_call.1} parent=51 // pred_fallthru
          _
      $region52: #{tpu_custom_call.1} parent=5 // pred_fallthru
        _
    $region6: #{tpu_custom_call.1} parent=1 // loop_footer
      %s21 = sadd.s32 1, %s17
    $region7: #{tpu_custom_call.1} parent=1 // loop_footer_branch
      %16 = sbr.rel target = $region3
    $region8: #{tpu_custom_call.1} parent=1 // loop_exit
      _
    %543 = vsyncpa [#allocation4], 1
    %s544 = scalar_lea.sflag [#allocation4], 1
    %545 = vsyncpa %s544, 1

</llo_original>
